<compile_context>
chip_gen: v5e
topology: v5e:2x2
jax: 0.10.0
libtpu: 0.0.40
codegen_flags: <defaults>
</compile_context>

<pallas_src>
import jax
import jax.numpy as jnp
from jax import lax
from jax.experimental import pallas as pl
from jax.experimental.pallas import tpu as pltpu


def _linear_single_block_kernel(x_ref, w_ref, b_ref, o_ref):
    """Whole problem in one tile: o = x @ W.T + b (no grid reduction, no RMW)."""
    o_ref[...] = (
        lax.dot_general(
            x_ref[...],
            w_ref[...],
            dimension_numbers=(((1,), (1,)), ((), ())),  # contract IN dim of both
            preferred_element_type=jnp.float32,
        )
        + b_ref[...]
    ).astype(o_ref.dtype)


def _linear_tiled_kernel(x_ref, w_ref, b_ref, o_ref):
    """One (tm, tn) output tile; accumulates over the K grid axis directly in o_ref.

    x_ref: (tm, tk)   activations
    w_ref: (tn, tk)   weight tile in PyTorch (OUT, IN) layout -> contract on dim 1
    b_ref: (1, tn)    bias tile
    o_ref: (tm, tn)   f32 output tile, resident across the K axis (accumulator)
    """
    k = pl.program_id(2)

    @pl.when(k == 0)
    def _():
        # Initialize with the broadcast bias instead of zeros: the epilogue is then
        # just the accumulated store, no extra add / acc->o copy.
        o_ref[...] = jnp.broadcast_to(b_ref[...], o_ref.shape).astype(o_ref.dtype)

    o_ref[...] += lax.dot_general(
        x_ref[...],
        w_ref[...],
        dimension_numbers=(((1,), (1,)), ((), ())),
        preferred_element_type=jnp.float32,
    ).astype(o_ref.dtype)


def _round_up(x, m):
    return ((x + m - 1) // m) * m


def _pick_tile(dim, cap, quantum):
    """Largest multiple of `quantum` <= cap covering dim; dim is padded up to it."""
    t = min(cap, _round_up(dim, quantum))
    return max(quantum, (t // quantum) * quantum)


@jax.jit
def neural_net_forward(x, weight, bias):
    """x: (B, IN) f32; weight: (OUT, IN) f32 (PyTorch layout); bias: (OUT,) f32."""
    B, IN = x.shape
    OUT = weight.shape[0]
    b2d = bias.reshape(1, OUT)

    # ---- Fast path: small layer fits a single tile (this module's shape). ----
    # Block shapes equal to the full array dims are legal without 128-lane padding,
    # so there is no pad/slice traffic and the kernel is a single fused step.
    if B <= 256 and OUT <= 256 and IN <= 512:
        return pl.pallas_call(
            _linear_single_block_kernel,
            out_shape=jax.ShapeDtypeStruct((B, OUT), x.dtype),
            grid_spec=pltpu.PrefetchScalarGridSpec(
                num_scalar_prefetch=0,
                grid=(1,),
                in_specs=[
                    pl.BlockSpec((B, IN), lambda i: (0, 0)),    # x
                    pl.BlockSpec((OUT, IN), lambda i: (0, 0)),  # weight (OUT, IN)
                    pl.BlockSpec((1, OUT), lambda i: (0, 0)),   # bias
                ],
                out_specs=pl.BlockSpec((B, OUT), lambda i: (0, 0)),
            ),
            cost_estimate=pl.CostEstimate(
                flops=2 * B * IN * OUT,
                transcendentals=0,
                bytes_accessed=4 * (B * IN + OUT * IN + OUT + B * OUT),
            ),
        )(x, weight, b2d)

    # ---- General tiled path for larger shapes. ----
    # Caps keep the double-buffered working set ~3 MiB: safe on v7x's 64 MiB VMEM
    # and far under v5e/v6e's 128 MiB.  (For big v6e-only workloads, raise caps and
    # vmem_limit_bytes; halve again for v7x.)
    tm = _pick_tile(B, 256, 8)
    tn = _pick_tile(OUT, 256, 128)
    tk = _pick_tile(IN, 512, 128)

    Bp = _round_up(B, tm)
    OUTp = _round_up(OUT, tn)
    INp = _round_up(IN, tk)

    # Zero-padding does not change the contraction; padded rows/cols sliced off after.
    xp = x if (Bp == B and INp == IN) else jnp.pad(x, ((0, Bp - B), (0, INp - IN)))
    wp = (weight if (OUTp == OUT and INp == IN)
          else jnp.pad(weight, ((0, OUTp - OUT), (0, INp - IN))))
    bp = b2d if OUTp == OUT else jnp.pad(b2d, ((0, 0), (0, OUTp - OUT)))

    grid = (Bp // tm, OUTp // tn, INp // tk)

    out_padded = pl.pallas_call(
        _linear_tiled_kernel,
        out_shape=jax.ShapeDtypeStruct((Bp, OUTp), x.dtype),
        grid_spec=pltpu.PrefetchScalarGridSpec(
            num_scalar_prefetch=0,
            grid=grid,
            in_specs=[
                pl.BlockSpec((tm, tk), lambda i, j, k: (i, k)),   # x
                pl.BlockSpec((tn, tk), lambda i, j, k: (j, k)),   # weight (OUT, IN)
                pl.BlockSpec((1, tn), lambda i, j, k: (0, j)),    # bias
            ],
            out_specs=pl.BlockSpec((tm, tn), lambda i, j, k: (i, j)),
        ),
        compiler_params=pltpu.CompilerParams(
            dimension_semantics=("parallel", "parallel", "arbitrary"),
        ),
        cost_estimate=pl.CostEstimate(
            flops=2 * Bp * INp * OUTp,
            transcendentals=0,
            # Count re-streaming of x / weight across the (i, j, k) grid.
            bytes_accessed=4 * (Bp * INp * (OUTp // tn)
                                + OUTp * INp * (Bp // tm)
                                + OUTp + Bp * OUTp),
        ),
    )(xp, wp, bp)

    if Bp == B and OUTp == OUT:
        return out_padded
    return out_padded[:B, :OUT]


if __name__ == "__main__":
    # Shapes implied by the module: NeuralNet(input_size=32, output_size=16), batch=8.
    B, IN, OUT = 8, 32, 16

    key = jax.random.PRNGKey(0)
    kx, kw, kb = jax.random.split(key, 3)

    x = jax.random.normal(kx, (B, IN), dtype=jnp.float32)
    # Deterministic param init mimicking nn.Linear's uniform(-1/sqrt(in), 1/sqrt(in)).
    bound = 1.0 / jnp.sqrt(jnp.float32(IN))
    weight = jax.random.uniform(kw, (OUT, IN), dtype=jnp.float32, minval=-bound, maxval=bound)
    bias = jax.random.uniform(kb, (OUT,), dtype=jnp.float32, minval=-bound, maxval=bound)

    out = neural_net_forward(x, weight, bias)
    out = jax.block_until_ready(out)

    # Correctness check against plain JAX reference.
    ref = x @ weight.T + bias
    assert out.shape == (B, OUT)
    assert jnp.allclose(out, ref, atol=1e-5, rtol=1e-5)

    print("KERNEL_OK")
</pallas_src>

<mosaic_0001>
module attributes {stable_mosaic.version = 11 : i64} {
  func.func @_linear_single_block_kernel(%arg0: i32, %arg1: memref<8x32xf32, #tpu.memory_space<vmem>>, %arg2: memref<16x32xf32, #tpu.memory_space<vmem>>, %arg3: memref<1x16xf32, #tpu.memory_space<vmem>>, %arg4: memref<8x16xf32, #tpu.memory_space<vmem>>) attributes {dimension_semantics = [#tpu.dimension_semantics<arbitrary>], iteration_bounds = array<i64: 1>, scalar_prefetch = 0 : i64, scratch_operands = 0 : i64, tpu.core_type = #tpu.core_type<tc>, window_params = [{pipeline_mode = #tpu.pipeline_mode<synchronous>, transform_indices = @transform_0, window_bounds = array<i64: 8, 32>}, {pipeline_mode = #tpu.pipeline_mode<synchronous>, transform_indices = @transform_1, window_bounds = array<i64: 16, 32>}, {pipeline_mode = #tpu.pipeline_mode<synchronous>, transform_indices = @transform_2, window_bounds = array<i64: 1, 16>}, {pipeline_mode = #tpu.pipeline_mode<synchronous>, transform_indices = @transform_3, window_bounds = array<i64: 8, 16>}]} {
    %c0 = arith.constant 0 : index
    %c0_0 = arith.constant 0 : index
    %0 = vector.load %arg1[%c0, %c0_0] : memref<8x32xf32, #tpu.memory_space<vmem>>, vector<8x32xf32>
    %c0_1 = arith.constant 0 : index
    %c0_2 = arith.constant 0 : index
    %1 = vector.load %arg2[%c0_1, %c0_2] : memref<16x32xf32, #tpu.memory_space<vmem>>, vector<16x32xf32>
    %cst = arith.constant dense<0.000000e+00> : vector<8x16xf32>
    %2 = tpu.matmul %0, %1, %cst {dimension_numbers = #tpu.dot_dimension_numbers<[1], [1], [0], [0], [0, 0, 1, 0], [], []>} : vector<8x32xf32>, vector<16x32xf32>, vector<8x16xf32> -> vector<8x16xf32>
    %c0_3 = arith.constant 0 : index
    %c0_4 = arith.constant 0 : index
    %3 = vector.load %arg3[%c0_3, %c0_4] : memref<1x16xf32, #tpu.memory_space<vmem>>, vector<1x16xf32>
    %4 = vector.broadcast %3 : vector<1x16xf32> to vector<8x16xf32>
    %5 = arith.addf %2, %4 : vector<8x16xf32>
    %c0_5 = arith.constant 0 : index
    %c0_6 = arith.constant 0 : index
    %6 = vector.load %arg4[%c0_5, %c0_6] : memref<8x16xf32, #tpu.memory_space<vmem>>, vector<8x16xf32>
    tpu.vector_store %arg4[%c0_5, %c0_6], %5 {strides = array<i32>} : memref<8x16xf32, #tpu.memory_space<vmem>>, vector<8x16xf32>,
    return
  }
  func.func @transform_0(%arg0: i32) -> (i32, i32) {
    %c0_i32 = arith.constant 0 : i32
    %c0_i32_0 = arith.constant 0 : i32
    %c0_i32_1 = arith.constant 0 : i32
    return %c0_i32, %c0_i32_0 : i32, i32
  }
  func.func @transform_1(%arg0: i32) -> (i32, i32) {
    %c0_i32 = arith.constant 0 : i32
    %c0_i32_0 = arith.constant 0 : i32
    %c0_i32_1 = arith.constant 0 : i32
    return %c0_i32, %c0_i32_0 : i32, i32
  }
  func.func @transform_2(%arg0: i32) -> (i32, i32) {
    %c0_i32 = arith.constant 0 : i32
    %c0_i32_0 = arith.constant 0 : i32
    %c0_i32_1 = arith.constant 0 : i32
    return %c0_i32, %c0_i32_0 : i32, i32
  }
  func.func @transform_3(%arg0: i32) -> (i32, i32) {
    %c0_i32 = arith.constant 0 : i32
    %c0_i32_0 = arith.constant 0 : i32
    %c0_i32_1 = arith.constant 0 : i32
    return %c0_i32, %c0_i32_0 : i32, i32
  }
}

</mosaic_0001>

<llo_original>
// kernel: neural_net_forward.1
$region0: #{neural_net_forward.1}
  #allocation0 [shape = 'u32[]', space=smem, size = 0x4, offset = 0x4, fixed_abs, tag = 'smem constant byte address 0x4 - core index']
  #allocation1 [shape = 'u32[72,128]{1,0:T(1,128)}', space=vmem, size = 0x9000, scoped, tag = 'internal scratch']
  %s0 = inlined_call_operand.hbm [shape: f32[8,32], index: 0, kind: input, shape index: {}]
  %s1 = inlined_call_operand.hbm [shape: f32[16,32], index: 1, kind: input, shape index: {}]
  %s2 = inlined_call_operand.vmem [shape: f32[1,16], index: 2, kind: input, shape index: {}]
  %s3 = inlined_call_operand.hbm [shape: f32[8,16], index: 3, kind: output, shape index: {}]
  %s4 = sld [smem:[#allocation0]]
  $region30: #{neural_net_forward.1} parent=0
    _
  %s6 = ssub.s32 1, %s4
  %s7 = scalar_select 0, %s6, %s4
  $region1: #{neural_net_forward.1} parent=0
    #allocation2 [shape = 'u8[4096]{0}', space=vmem, size = 0x1000, scoped, tag = 'input window, operand 0, single buffered']
    #allocation3 [shape = 's32[1]{0}', space=sflag, size = 0x4, scoped, tag = 'scoped memory for neural_net_forward.1']
    #allocation4 [shape = 's32[1]{0}', space=sflag, size = 0x4, scoped, tag = 'scoped memory for neural_net_forward.1']
    #allocation5 [shape = 'u8[8192]{0}', space=vmem, size = 0x2000, scoped, tag = 'input window, operand 1, single buffered']
    #allocation6 [shape = 's32[1]{0}', space=sflag, size = 0x4, scoped, tag = 'scoped memory for neural_net_forward.1']
    #allocation7 [shape = 'u8[4096]{0}', space=vmem, size = 0x1000, scoped, tag = 'output window, operand 0, single buffered']
    %8 = vsyncpa [#allocation3], 0
    %9 = vsyncpa [#allocation6], 0
    %10 = vsyncpa [#allocation4], 0
    // Predicated region
    $region2: #{neural_net_forward.1} parent=1 // pred_check
      _
    $region3: #{neural_net_forward.1} parent=1 // pred_check_branch
      %12 = sbr.rel (0) target = $region5
    $region4: #{neural_net_forward.1} parent=1 // pred_region
      %14 = vsyncadd [#allocation3], 0
      %s16 = sshll.u32 %s0, 4
      %s17 = int_to_ptr.hbm [resolvable:$true] %s16
      %s18 = sshll.u32 [#allocation2], 4
      %s19 = int_to_ptr.vmem [resolvable:$true] %s18
      %21 = dma.hbm_to_vmem [thread:$0]  %s17, 128, %s19, [#allocation3]
    $region5: #{neural_net_forward.1} parent=1 // pred_fallthru
      _
    // Predicated region
    $region6: #{neural_net_forward.1} parent=1 // pred_check
      _
    $region7: #{neural_net_forward.1} parent=1 // pred_check_branch
      %23 = sbr.rel (0) target = $region9
    $region8: #{neural_net_forward.1} parent=1 // pred_region
      %25 = vsyncadd [#allocation6], 0
      %s26 = sshll.u32 %s1, 4
      %s27 = int_to_ptr.hbm [resolvable:$true] %s26
      %s28 = sshll.u32 [#allocation5], 4
      %s29 = int_to_ptr.vmem [resolvable:$true] %s28
      %34 = dma.hbm_to_vmem [thread:$0]  %s27, 256, %s29, [#allocation6], 128, 128, 8
    $region9: #{neural_net_forward.1} parent=1 // pred_fallthru
      _
    // Predicated region
    $region10: #{neural_net_forward.1} parent=1 // pred_check
      _
    $region11: #{neural_net_forward.1} parent=1 // pred_check_branch
      %36 = sbr.rel (0) target = $region13
    $region12: #{neural_net_forward.1} parent=1 // pred_region
      _
    $region13: #{neural_net_forward.1} parent=1 // pred_fallthru
      _
    // Predicated region
    $region14: #{neural_net_forward.1} parent=1 // pred_check
      _
    $region15: #{neural_net_forward.1} parent=1 // pred_check_branch
      %38 = sbr.rel (0) target = $region17
    $region16: #{neural_net_forward.1} parent=1 // pred_region
      %40 = dma.done [#allocation3], 128
    $region17: #{neural_net_forward.1} parent=1 // pred_fallthru
      _
    // Predicated region
    $region18: #{neural_net_forward.1} parent=1 // pred_check
      _
    $region19: #{neural_net_forward.1} parent=1 // pred_check_branch
      %42 = sbr.rel (0) target = $region21
    $region20: #{neural_net_forward.1} parent=1 // pred_region
      %44 = dma.done [#allocation6], 256
    $region21: #{neural_net_forward.1} parent=1 // pred_fallthru
      _
    %v45 = vld [vmem:[#allocation2] sm:$0xff]
    %v46 = vld [vmem:[#allocation5] sm:$0xff]
    %v47 = vld [vmem:[#allocation5 + $0x8] sm:$0xff]
    %v48 = vld [vmem:[%s2] sm:$0x1]
    %v50 = vperm.slane %v48, 0
    %vm52 = vcmask 261120
    %v54 = vsel %vm52, %v45, 0
    %v57 = vsel %vm52, %v46, 0
    %v60 = vsel %vm52, %v47, 0
    %62 = vmatpush.xpose.msra.mxu0 0.0
    %63 = vmatpush.xpose.msra.mxu0 0.0
    %64 = vmatpush.xpose.msra.mxu0 0.0
    %65 = vmatpush.xpose.msra.mxu0 0.0
    %66 = vmatpush.xpose.msra.mxu0 0.0
    %67 = vmatpush.xpose.msra.mxu0 0.0
    %68 = vmatpush.xpose.msra.mxu0 0.0
    %69 = vmatpush.xpose.msra.mxu0 0.0
    %70 = vmatpush.xpose.msra.mxu0 0.0
    %71 = vmatpush.xpose.msra.mxu0 0.0
    %72 = vmatpush.xpose.msra.mxu0 0.0
    %73 = vmatpush.xpose.msra.mxu0 0.0
    %74 = vmatpush.xpose.msra.mxu0 0.0
    %75 = vmatpush.xpose.msra.mxu0 0.0
    %76 = vmatpush.xpose.msra.mxu0 %v60
    %77 = vmatpush.xpose.msra.mxu0 %v57
    %78 = vmatmul.f32.gmra.mxu0 %v54
    %v79 = vpop.f32.mrf.mxu0
    %v80 = vadd.f32 %v50, %v79
    %81 = vdwg.mxu0
    %vm82 = vcmask 130048
    %83 = vst.msk [vmem:[#allocation7] sm:$0xff] %vm82, %v80
    // Predicated region
    $region22: #{neural_net_forward.1} parent=1 // pred_check
      _
    $region23: #{neural_net_forward.1} parent=1 // pred_check_branch
      %85 = sbr.rel (0) target = $region25
    $region24: #{neural_net_forward.1} parent=1 // pred_region
      %87 = vsyncadd [#allocation4], 0
      %s89 = sshll.u32 [#allocation7], 4
      %s90 = int_to_ptr.vmem [resolvable:$true] %s89
      %s91 = sshll.u32 %s3, 4
      %s92 = int_to_ptr.hbm [resolvable:$true] %s91
      %94 = dma.vmem_to_hbm [thread:$0]  %s90, 128, %s92, [#allocation4]
    $region25: #{neural_net_forward.1} parent=1 // pred_fallthru
      _
    // Predicated region
    $region26: #{neural_net_forward.1} parent=1 // pred_check
      _
    $region27: #{neural_net_forward.1} parent=1 // pred_check_branch
      %96 = sbr.rel (0) target = $region29
    $region28: #{neural_net_forward.1} parent=1 // pred_region
      %98 = dma.done [#allocation4], 128
    $region29: #{neural_net_forward.1} parent=1 // pred_fallthru
      _
    %99 = vsyncpa [#allocation3], 1
    %100 = vsyncpa [#allocation6], 1
    %101 = vsyncpa [#allocation4], 1

</llo_original>
